<compile_context>
chip_gen: v7x
topology: tpu7x:2x2x1
jax: 0.10.0
libtpu: 0.0.40
codegen_flags: <defaults>
</compile_context>

<pallas_src>
import functools

import jax
import jax.numpy as jnp
from jax.experimental import pallas as pl
from jax.experimental.pallas import tpu as pltpu

_EPS = 1e-8
_HALF_LOG_2PI = 0.9189385332046727  # 0.5 * log(2*pi)

# Lanczos approximation (g = 5, n = 6) coefficients (Numerical Recipes) —
# relative error ~2e-10 in double, far below f32 eps, at 2/3 the Horner cost
# of the previous g=7, n=9 fit.
_LANCZOS_G = 5.0
_LANCZOS_COEFS = (
    1.000000000190015,
    76.18009172947146,
    -86.50532032941677,
    24.01409824083091,
    -1.231739572450155,
    0.1208650973866179e-2,
    -0.5395239384953e-5,
)


# ---- build the rational form P(w)/Q(w) of the Lanczos series at import time ----
# A(w) = c0 + sum_i c_i / (w + i)  ==  P(w) / Q(w),  Q(w) = prod_i (w + i)
def _poly_mul(a, b):
    out = [0.0] * (len(a) + len(b) - 1)
    for i, ai in enumerate(a):
        for j, bj in enumerate(b):
            out[i + j] += ai * bj
    return out


def _poly_add(a, b):
    n = max(len(a), len(b))
    a = a + [0.0] * (n - len(a))
    b = b + [0.0] * (n - len(b))
    return [x + y for x, y in zip(a, b)]


def _lanczos_rational():
    n = len(_LANCZOS_COEFS) - 1  # 6
    q = [1.0]
    for i in range(1, n + 1):
        q = _poly_mul(q, [float(i), 1.0])
    p = [_LANCZOS_COEFS[0] * c for c in q]
    for i in range(1, n + 1):
        qi = [1.0]
        for j in range(1, n + 1):
            if j != i:
                qi = _poly_mul(qi, [float(j), 1.0])
        p = _poly_add(p, [_LANCZOS_COEFS[i] * c for c in qi])
    return tuple(p), tuple(q)  # coefficients low -> high degree


_LANCZOS_P, _LANCZOS_Q = _lanczos_rational()


def _horner(coeffs_low_to_high, w):
    # Start as c[-1]*w + c[-2]: avoids a redundant vreg broadcast per chain.
    acc = coeffs_low_to_high[-1] * w + coeffs_low_to_high[-2]
    for c in reversed(coeffs_low_to_high[:-2]):
        acc = acc * w + c
    return acc


def _recip(x):
    # EUP approximate reciprocal (+ one Newton step -> ~f32 accuracy, no divide).
    r = pl.reciprocal(x, approx=True)
    return r * (2.0 - x * r)


def _nb_partial_kernel(x_ref, mu_ref, theta_ref, out_ref, *,
                       tile_b, tile_d, total_b, total_d,
                       mask_rows, mask_cols):
    # cast in VMEM (inputs may be bf16); all math in f32
    x = x_ref[...].astype(jnp.float32)
    mu = mu_ref[...].astype(jnp.float32)
    theta = theta_ref[...].astype(jnp.float32)

    log_theta_mu_eps = jnp.log(theta + mu + _EPS)
    res = (theta * (jnp.log(theta + _EPS) - log_theta_mu_eps)
           + x * (jnp.log(mu + _EPS) - log_theta_mu_eps))

    # ---- lgamma(x+theta) - lgamma(theta) - lgamma(x+1), variable part ----
    # lgamma(z) = (w+0.5)*log(w+g+0.5) - (w+g+0.5) + 0.5*log(2pi) + log(P(w)/Q(w)),
    # w = z-1.  Constant pieces (-t and 0.5*log(2pi)) cancel to 5.5 - 0.5*log(2pi)
    # per element and are re-added in the wrapper.
    w1 = x + theta - 1.0    # z1 = x + theta
    w2 = theta - 1.0        # z2 = theta
    w3 = x                  # z3 = x + 1

    g_half = _LANCZOS_G + 0.5
    res += (w1 + 0.5) * jnp.log(w1 + g_half)
    res -= (w2 + 0.5) * jnp.log(w2 + g_half)
    res -= (w3 + 0.5) * jnp.log(w3 + g_half)

    # log(A1) - log(A2) - log(A3) as ONE log of a product of O(1)-bounded ratios.
    rat = (_horner(_LANCZOS_P, w1) * _recip(_horner(_LANCZOS_Q, w1))
           * _horner(_LANCZOS_Q, w2) * _recip(_horner(_LANCZOS_P, w2))
           * _horner(_LANCZOS_Q, w3) * _recip(_horner(_LANCZOS_P, w3)))
    res += jnp.log(rat)

    # Ragged tiles: select-mask (NOT multiplicative) so garbage NaN/Inf rows/cols
    # from out-of-bounds reads are discarded.
    if mask_rows or mask_cols:
        valid = None
        if mask_rows:
            row = jax.lax.broadcasted_iota(jnp.int32, res.shape, 0)
            valid = pl.program_id(0) * tile_b + row < total_b
        if mask_cols:
            col = jax.lax.broadcasted_iota(jnp.int32, res.shape, 1)
            cvalid = pl.program_id(1) * tile_d + col < total_d
            valid = cvalid if valid is None else (valid & cvalid)
        res = jnp.where(valid, res, 0.0)

    # sublane reduce only; lane-dense (1, tile_d) partial-sum store per tile
    out_ref[...] = jnp.sum(res, axis=0, keepdims=True)


def _vmem_limit_bytes():
    """Explicit scoped-VMEM limit, sized per generation (<= 1/2 physical)."""
    try:
        cap = int(pltpu.get_tpu_info().vmem_capacity_bytes)
    except Exception:
        cap = 64 << 20  # conservative fallback (v7x physical)
    return int(min(max(cap // 2, 16 << 20), 64 << 20))


def _sublane_multiple(dtypes):
    min_item = min(jnp.dtype(d).itemsize for d in dtypes)
    return max(8, 32 // min_item)   # 8 for f32, 16 for bf16, 32 for int8


def _pick_tiles(batch, genes, dtypes):
    itemsizes = [jnp.dtype(d).itemsize for d in dtypes]
    sum_item = sum(itemsizes)
    sub = _sublane_multiple(dtypes)
    # Budget for the 3 double-buffered input tiles: ~1/3 of the scoped limit.
    budget = max(8 << 20, _vmem_limit_bytes() // 3)

    # Gene (lane) tiling only when even a minimum-height tile would not fit
    # (very wide D, e.g. >~40k genes at f32).
    if genes <= 128 or 2 * sub * genes * sum_item <= budget:
        tile_d = genes
    else:
        tile_d = (budget // (2 * sub * sum_item * 128)) * 128
        tile_d = max(128, min(tile_d, (genes // 128) * 128))

    # Batch (sublane) tiling: biggest multiple of `sub` that fits the budget.
    tile_b = budget // (2 * tile_d * sum_item)
    tile_b = max(sub, (tile_b // sub) * sub)
    if tile_b >= batch:
        if tile_d >= genes and batch >= 2 * sub:
            # Guarantee >= 2 grid steps so both v7x TensorCores get work
            # (grid axes are "parallel"); harmless on single-TC v5e/v6e.
            half = -(-batch // 2)
            tile_b = -(-half // sub) * sub
        else:
            tile_b = batch
    return tile_b, tile_d


def negative_binomial_loss(preds, target, *, tile_b=None, tile_d=None):
    """Pallas implementation of MyNegativeBinomialLoss.forward.

    preds : tuple/list whose first two elements are (mu, theta), each [B, D]
    target: observed counts, [B, D]
    Returns a scalar float32 loss.
    """
    mu, theta = preds[0], preds[1]
    batch, genes = target.shape
    dtypes = (target.dtype, mu.dtype, theta.dtype)
    sub = _sublane_multiple(dtypes)

    auto_b, auto_d = _pick_tiles(batch, genes, dtypes)
    if tile_d is None:
        tile_d = auto_d
    if tile_b is None:
        tile_b = auto_b
    tile_b = min(tile_b, batch)
    tile_d = min(tile_d, genes)
    if tile_b < batch and tile_b % sub != 0:
        raise ValueError(f"tile_b must be a multiple of {sub} when smaller than batch")
    if tile_d < genes and tile_d % 128 != 0:
        raise ValueError("tile_d must be a multiple of 128 when smaller than genes")

    grid_b = pl.cdiv(batch, tile_b)
    grid_d = pl.cdiv(genes, tile_d)
    mask_rows = (batch % tile_b) != 0
    mask_cols = (genes % tile_d) != 0

    kernel = functools.partial(
        _nb_partial_kernel, tile_b=tile_b, tile_d=tile_d,
        total_b=batch, total_d=genes,
        mask_rows=mask_rows, mask_cols=mask_cols)

    partials = pl.pallas_call(
        kernel,
        out_shape=jax.ShapeDtypeStruct((grid_b, grid_d * tile_d), jnp.float32),
        grid=(grid_b, grid_d),
        in_specs=[
            pl.BlockSpec((tile_b, tile_d), lambda i, j: (i, j)),
            pl.BlockSpec((tile_b, tile_d), lambda i, j: (i, j)),
            pl.BlockSpec((tile_b, tile_d), lambda i, j: (i, j)),
        ],
        out_specs=pl.BlockSpec((1, tile_d), lambda i, j: (i, j)),
        compiler_params=pltpu.CompilerParams(
            dimension_semantics=("parallel", "parallel"),
            vmem_limit_bytes=_vmem_limit_bytes()),
    )(target, mu, theta)

    n = batch * genes
    # Re-add the folded per-element constant:
    #   lgamma(x+theta) - lgamma(theta) - lgamma(x+1)
    #     = (variable parts) + (g + 0.5) - 0.5*log(2*pi)
    # loss = -mean(res) = -sum(res_var)/n - (5.5 - 0.5*log(2*pi))
    return -(jnp.sum(partials) / n) - (_LANCZOS_G + 0.5 - _HALF_LOG_2PI)


def _reference_loss(preds, target):
    """Pure-JAX reference (uses lax.lgamma) for sanity checking."""
    mu, theta = preds[0], preds[1]
    x = target.astype(jnp.float32)
    mu = mu.astype(jnp.float32)
    theta = theta.astype(jnp.float32)
    log_theta_mu_eps = jnp.log(theta + mu + _EPS)
    res = (theta * (jnp.log(theta + _EPS) - log_theta_mu_eps)
           + x * (jnp.log(mu + _EPS) - log_theta_mu_eps)
           + jax.lax.lgamma(x + theta)
           - jax.lax.lgamma(theta)
           - jax.lax.lgamma(x + 1.0))
    return -jnp.mean(res)


if __name__ == "__main__":
    def make_inputs(key, batch, genes):
        k_mu, k_theta, k_x = jax.random.split(key, 3)
        # mu (NB mean): positive
        mu = jax.nn.softplus(jax.random.normal(k_mu, (batch, genes), jnp.float32)) + 0.1
        # theta (inverse dispersion): positive
        theta = jax.random.uniform(k_theta, (batch, genes), jnp.float32,
                                   minval=0.5, maxval=2.5)
        # target: non-negative observed counts
        target = jnp.floor(
            jax.nn.softplus(jax.random.normal(k_x, (batch, genes), jnp.float32)) * 3.0)
        return (mu, theta), target

    root = jax.random.PRNGKey(0)

    # Case 1: small single-block shape.
    preds, target = make_inputs(jax.random.fold_in(root, 0), 8, 128)
    loss = jax.block_until_ready(negative_binomial_loss(preds, target))
    ref = jax.block_until_ready(_reference_loss(preds, target))
    assert jnp.isfinite(loss), "non-finite loss"
    assert jnp.allclose(loss, ref, rtol=2e-3, atol=2e-3), (loss, ref)

    # Case 2: multi-step batch grid with a ragged last tile (row-mask path).
    preds2, target2 = make_inputs(jax.random.fold_in(root, 1), 40, 256)
    loss2 = jax.block_until_ready(negative_binomial_loss(preds2, target2, tile_b=16))
    ref2 = jax.block_until_ready(_reference_loss(preds2, target2))
    assert jnp.isfinite(loss2), "non-finite loss (grid case)"
    assert jnp.allclose(loss2, ref2, rtol=2e-3, atol=2e-3), (loss2, ref2)

    # Case 3: 2-D grid with ragged batch AND gene tiles (row + column masks).
    preds3, target3 = make_inputs(jax.random.fold_in(root, 2), 24, 320)
    loss3 = jax.block_until_ready(
        negative_binomial_loss(preds3, target3, tile_b=16, tile_d=128))
    ref3 = jax.block_until_ready(_reference_loss(preds3, target3))
    assert jnp.isfinite(loss3), "non-finite loss (2-D grid case)"
    assert jnp.allclose(loss3, ref3, rtol=2e-3, atol=2e-3), (loss3, ref3)

    print("KERNEL_OK")
</pallas_src>

<mosaic_0001>
module attributes {stable_mosaic.version = 11 : i64} {
  func.func @_nb_partial_kernel(%arg0: i32, %arg1: i32, %arg2: memref<8x128xf32, #tpu.memory_space<vmem>>, %arg3: memref<8x128xf32, #tpu.memory_space<vmem>>, %arg4: memref<8x128xf32, #tpu.memory_space<vmem>>, %arg5: memref<1x128xf32, #tpu.memory_space<vmem>>) attributes {dimension_semantics = [#tpu.dimension_semantics<parallel>, #tpu.dimension_semantics<parallel>], iteration_bounds = array<i64: 1, 1>, scalar_prefetch = 0 : i64, scratch_operands = 0 : i64, tpu.core_type = #tpu.core_type<tc>, window_params = [{transform_indices = @transform_0, window_bounds = array<i64: 8, 128>}, {transform_indices = @transform_1, window_bounds = array<i64: 8, 128>}, {transform_indices = @transform_2, window_bounds = array<i64: 8, 128>}, {transform_indices = @transform_3, window_bounds = array<i64: 1, 128>}]} {
    %c0 = arith.constant 0 : index
    %c0_0 = arith.constant 0 : index
    %0 = vector.load %arg2[%c0, %c0_0] : memref<8x128xf32, #tpu.memory_space<vmem>>, vector<8x128xf32>
    %c0_1 = arith.constant 0 : index
    %c0_2 = arith.constant 0 : index
    %1 = vector.load %arg3[%c0_1, %c0_2] : memref<8x128xf32, #tpu.memory_space<vmem>>, vector<8x128xf32>
    %c0_3 = arith.constant 0 : index
    %c0_4 = arith.constant 0 : index
    %2 = vector.load %arg4[%c0_3, %c0_4] : memref<8x128xf32, #tpu.memory_space<vmem>>, vector<8x128xf32>
    %3 = arith.addf %2, %1 : vector<8x128xf32>
    %cst = arith.constant 9.99999993E-9 : f32
    %4 = vector.broadcast %cst : f32 to vector<8x128xf32>
    %5 = arith.addf %3, %4 : vector<8x128xf32>
    %6 = math.log %5 : vector<8x128xf32>
    %cst_5 = arith.constant 9.99999993E-9 : f32
    %7 = vector.broadcast %cst_5 : f32 to vector<8x128xf32>
    %8 = arith.addf %2, %7 : vector<8x128xf32>
    %9 = math.log %8 : vector<8x128xf32>
    %10 = arith.subf %9, %6 : vector<8x128xf32>
    %11 = arith.mulf %2, %10 : vector<8x128xf32>
    %cst_6 = arith.constant 9.99999993E-9 : f32
    %12 = vector.broadcast %cst_6 : f32 to vector<8x128xf32>
    %13 = arith.addf %1, %12 : vector<8x128xf32>
    %14 = math.log %13 : vector<8x128xf32>
    %15 = arith.subf %14, %6 : vector<8x128xf32>
    %16 = arith.mulf %0, %15 : vector<8x128xf32>
    %17 = arith.addf %11, %16 : vector<8x128xf32>
    %18 = arith.addf %0, %2 : vector<8x128xf32>
    %cst_7 = arith.constant 1.000000e+00 : f32
    %19 = vector.broadcast %cst_7 : f32 to vector<8x128xf32>
    %20 = arith.subf %18, %19 : vector<8x128xf32>
    %cst_8 = arith.constant 1.000000e+00 : f32
    %21 = vector.broadcast %cst_8 : f32 to vector<8x128xf32>
    %22 = arith.subf %2, %21 : vector<8x128xf32>
    %cst_9 = arith.constant 5.000000e-01 : f32
    %23 = vector.broadcast %cst_9 : f32 to vector<8x128xf32>
    %24 = arith.addf %20, %23 : vector<8x128xf32>
    %cst_10 = arith.constant 5.500000e+00 : f32
    %25 = vector.broadcast %cst_10 : f32 to vector<8x128xf32>
    %26 = arith.addf %20, %25 : vector<8x128xf32>
    %27 = math.log %26 : vector<8x128xf32>
    %28 = arith.mulf %24, %27 : vector<8x128xf32>
    %29 = arith.addf %17, %28 : vector<8x128xf32>
    %cst_11 = arith.constant 5.000000e-01 : f32
    %30 = vector.broadcast %cst_11 : f32 to vector<8x128xf32>
    %31 = arith.addf %22, %30 : vector<8x128xf32>
    %cst_12 = arith.constant 5.500000e+00 : f32
    %32 = vector.broadcast %cst_12 : f32 to vector<8x128xf32>
    %33 = arith.addf %22, %32 : vector<8x128xf32>
    %34 = math.log %33 : vector<8x128xf32>
    %35 = arith.mulf %31, %34 : vector<8x128xf32>
    %36 = arith.subf %29, %35 : vector<8x128xf32>
    %cst_13 = arith.constant 5.000000e-01 : f32
    %37 = vector.broadcast %cst_13 : f32 to vector<8x128xf32>
    %38 = arith.addf %0, %37 : vector<8x128xf32>
    %cst_14 = arith.constant 5.500000e+00 : f32
    %39 = vector.broadcast %cst_14 : f32 to vector<8x128xf32>
    %40 = arith.addf %0, %39 : vector<8x128xf32>
    %41 = math.log %40 : vector<8x128xf32>
    %42 = arith.mulf %38, %41 : vector<8x128xf32>
    %43 = arith.subf %36, %42 : vector<8x128xf32>
    %cst_15 = arith.constant 1.000000e+00 : f32
    %44 = vector.broadcast %cst_15 : f32 to vector<8x128xf32>
    %45 = arith.mulf %44, %20 : vector<8x128xf32>
    %cst_16 = arith.constant 33.4583321 : f32
    %46 = vector.broadcast %cst_16 : f32 to vector<8x128xf32>
    %47 = arith.addf %45, %46 : vector<8x128xf32>
    %48 = arith.mulf %47, %20 : vector<8x128xf32>
    %cst_17 = arith.constant 466.334198 : f32
    %49 = vector.broadcast %cst_17 : f32 to vector<8x128xf32>
    %50 = arith.addf %48, %49 : vector<8x128xf32>
    %51 = arith.mulf %50, %20 : vector<8x128xf32>
    %cst_18 = arith.constant 3465.70947 : f32
    %52 = vector.broadcast %cst_18 : f32 to vector<8x128xf32>
    %53 = arith.addf %51, %52 : vector<8x128xf32>
    %54 = arith.mulf %53, %20 : vector<8x128xf32>
    %cst_19 = arith.constant 14484.9141 : f32
    %55 = vector.broadcast %cst_19 : f32 to vector<8x128xf32>
    %56 = arith.addf %54, %55 : vector<8x128xf32>
    %57 = arith.mulf %56, %20 : vector<8x128xf32>
    %cst_20 = arith.constant 32281.0645 : f32
    %58 = vector.broadcast %cst_20 : f32 to vector<8x128xf32>
    %59 = arith.addf %57, %58 : vector<8x128xf32>
    %60 = arith.mulf %59, %20 : vector<8x128xf32>
    %cst_21 = arith.constant 29969.5938 : f32
    %61 = vector.broadcast %cst_21 : f32 to vector<8x128xf32>
    %62 = arith.addf %60, %61 : vector<8x128xf32>
    %cst_22 = arith.constant 1.000000e+00 : f32
    %63 = vector.broadcast %cst_22 : f32 to vector<8x128xf32>
    %64 = arith.mulf %63, %20 : vector<8x128xf32>
    %cst_23 = arith.constant 2.100000e+01 : f32
    %65 = vector.broadcast %cst_23 : f32 to vector<8x128xf32>
    %66 = arith.addf %64, %65 : vector<8x128xf32>
    %67 = arith.mulf %66, %20 : vector<8x128xf32>
    %cst_24 = arith.constant 1.750000e+02 : f32
    %68 = vector.broadcast %cst_24 : f32 to vector<8x128xf32>
    %69 = arith.addf %67, %68 : vector<8x128xf32>
    %70 = arith.mulf %69, %20 : vector<8x128xf32>
    %cst_25 = arith.constant 7.350000e+02 : f32
    %71 = vector.broadcast %cst_25 : f32 to vector<8x128xf32>
    %72 = arith.addf %70, %71 : vector<8x128xf32>
    %73 = arith.mulf %72, %20 : vector<8x128xf32>
    %cst_26 = arith.constant 1.624000e+03 : f32
    %74 = vector.broadcast %cst_26 : f32 to vector<8x128xf32>
    %75 = arith.addf %73, %74 : vector<8x128xf32>
    %76 = arith.mulf %75, %20 : vector<8x128xf32>
    %cst_27 = arith.constant 1.764000e+03 : f32
    %77 = vector.broadcast %cst_27 : f32 to vector<8x128xf32>
    %78 = arith.addf %76, %77 : vector<8x128xf32>
    %79 = arith.mulf %78, %20 : vector<8x128xf32>
    %cst_28 = arith.constant 7.200000e+02 : f32
    %80 = vector.broadcast %cst_28 : f32 to vector<8x128xf32>
    %81 = arith.addf %79, %80 : vector<8x128xf32>
    %82 = tpu.reciprocal %81 {approx = true} : vector<8x128xf32> -> vector<8x128xf32>
    %83 = arith.mulf %81, %82 : vector<8x128xf32>
    %cst_29 = arith.constant 2.000000e+00 : f32
    %84 = vector.broadcast %cst_29 : f32 to vector<8x128xf32>
    %85 = arith.subf %84, %83 : vector<8x128xf32>
    %86 = arith.mulf %82, %85 : vector<8x128xf32>
    %87 = arith.mulf %62, %86 : vector<8x128xf32>
    %cst_30 = arith.constant 1.000000e+00 : f32
    %88 = vector.broadcast %cst_30 : f32 to vector<8x128xf32>
    %89 = arith.mulf %88, %22 : vector<8x128xf32>
    %cst_31 = arith.constant 2.100000e+01 : f32
    %90 = vector.broadcast %cst_31 : f32 to vector<8x128xf32>
    %91 = arith.addf %89, %90 : vector<8x128xf32>
    %92 = arith.mulf %91, %22 : vector<8x128xf32>
    %cst_32 = arith.constant 1.750000e+02 : f32
    %93 = vector.broadcast %cst_32 : f32 to vector<8x128xf32>
    %94 = arith.addf %92, %93 : vector<8x128xf32>
    %95 = arith.mulf %94, %22 : vector<8x128xf32>
    %cst_33 = arith.constant 7.350000e+02 : f32
    %96 = vector.broadcast %cst_33 : f32 to vector<8x128xf32>
    %97 = arith.addf %95, %96 : vector<8x128xf32>
    %98 = arith.mulf %97, %22 : vector<8x128xf32>
    %cst_34 = arith.constant 1.624000e+03 : f32
    %99 = vector.broadcast %cst_34 : f32 to vector<8x128xf32>
    %100 = arith.addf %98, %99 : vector<8x128xf32>
    %101 = arith.mulf %100, %22 : vector<8x128xf32>
    %cst_35 = arith.constant 1.764000e+03 : f32
    %102 = vector.broadcast %cst_35 : f32 to vector<8x128xf32>
    %103 = arith.addf %101, %102 : vector<8x128xf32>
    %104 = arith.mulf %103, %22 : vector<8x128xf32>
    %cst_36 = arith.constant 7.200000e+02 : f32
    %105 = vector.broadcast %cst_36 : f32 to vector<8x128xf32>
    %106 = arith.addf %104, %105 : vector<8x128xf32>
    %107 = arith.mulf %87, %106 : vector<8x128xf32>
    %cst_37 = arith.constant 1.000000e+00 : f32
    %108 = vector.broadcast %cst_37 : f32 to vector<8x128xf32>
    %109 = arith.mulf %108, %22 : vector<8x128xf32>
    %cst_38 = arith.constant 33.4583321 : f32
    %110 = vector.broadcast %cst_38 : f32 to vector<8x128xf32>
    %111 = arith.addf %109, %110 : vector<8x128xf32>
    %112 = arith.mulf %111, %22 : vector<8x128xf32>
    %cst_39 = arith.constant 466.334198 : f32
    %113 = vector.broadcast %cst_39 : f32 to vector<8x128xf32>
    %114 = arith.addf %112, %113 : vector<8x128xf32>
    %115 = arith.mulf %114, %22 : vector<8x128xf32>
    %cst_40 = arith.constant 3465.70947 : f32
    %116 = vector.broadcast %cst_40 : f32 to vector<8x128xf32>
    %117 = arith.addf %115, %116 : vector<8x128xf32>
    %118 = arith.mulf %117, %22 : vector<8x128xf32>
    %cst_41 = arith.constant 14484.9141 : f32
    %119 = vector.broadcast %cst_41 : f32 to vector<8x128xf32>
    %120 = arith.addf %118, %119 : vector<8x128xf32>
    %121 = arith.mulf %120, %22 : vector<8x128xf32>
    %cst_42 = arith.constant 32281.0645 : f32
    %122 = vector.broadcast %cst_42 : f32 to vector<8x128xf32>
    %123 = arith.addf %121, %122 : vector<8x128xf32>
    %124 = arith.mulf %123, %22 : vector<8x128xf32>
    %cst_43 = arith.constant 29969.5938 : f32
    %125 = vector.broadcast %cst_43 : f32 to vector<8x128xf32>
    %126 = arith.addf %124, %125 : vector<8x128xf32>
    %127 = tpu.reciprocal %126 {approx = true} : vector<8x128xf32> -> vector<8x128xf32>
    %128 = arith.mulf %126, %127 : vector<8x128xf32>
    %cst_44 = arith.constant 2.000000e+00 : f32
    %129 = vector.broadcast %cst_44 : f32 to vector<8x128xf32>
    %130 = arith.subf %129, %128 : vector<8x128xf32>
    %131 = arith.mulf %127, %130 : vector<8x128xf32>
    %132 = arith.mulf %107, %131 : vector<8x128xf32>
    %cst_45 = arith.constant 1.000000e+00 : f32
    %133 = vector.broadcast %cst_45 : f32 to vector<8x128xf32>
    %134 = arith.mulf %133, %0 : vector<8x128xf32>
    %cst_46 = arith.constant 2.100000e+01 : f32
    %135 = vector.broadcast %cst_46 : f32 to vector<8x128xf32>
    %136 = arith.addf %134, %135 : vector<8x128xf32>
    %137 = arith.mulf %136, %0 : vector<8x128xf32>
    %cst_47 = arith.constant 1.750000e+02 : f32
    %138 = vector.broadcast %cst_47 : f32 to vector<8x128xf32>
    %139 = arith.addf %137, %138 : vector<8x128xf32>
    %140 = arith.mulf %139, %0 : vector<8x128xf32>
    %cst_48 = arith.constant 7.350000e+02 : f32
    %141 = vector.broadcast %cst_48 : f32 to vector<8x128xf32>
    %142 = arith.addf %140, %141 : vector<8x128xf32>
    %143 = arith.mulf %142, %0 : vector<8x128xf32>
    %cst_49 = arith.constant 1.624000e+03 : f32
    %144 = vector.broadcast %cst_49 : f32 to vector<8x128xf32>
    %145 = arith.addf %143, %144 : vector<8x128xf32>
    %146 = arith.mulf %145, %0 : vector<8x128xf32>
    %cst_50 = arith.constant 1.764000e+03 : f32
    %147 = vector.broadcast %cst_50 : f32 to vector<8x128xf32>
    %148 = arith.addf %146, %147 : vector<8x128xf32>
    %149 = arith.mulf %148, %0 : vector<8x128xf32>
    %cst_51 = arith.constant 7.200000e+02 : f32
    %150 = vector.broadcast %cst_51 : f32 to vector<8x128xf32>
    %151 = arith.addf %149, %150 : vector<8x128xf32>
    %152 = arith.mulf %132, %151 : vector<8x128xf32>
    %cst_52 = arith.constant 1.000000e+00 : f32
    %153 = vector.broadcast %cst_52 : f32 to vector<8x128xf32>
    %154 = arith.mulf %153, %0 : vector<8x128xf32>
    %cst_53 = arith.constant 33.4583321 : f32
    %155 = vector.broadcast %cst_53 : f32 to vector<8x128xf32>
    %156 = arith.addf %154, %155 : vector<8x128xf32>
    %157 = arith.mulf %156, %0 : vector<8x128xf32>
    %cst_54 = arith.constant 466.334198 : f32
    %158 = vector.broadcast %cst_54 : f32 to vector<8x128xf32>
    %159 = arith.addf %157, %158 : vector<8x128xf32>
    %160 = arith.mulf %159, %0 : vector<8x128xf32>
    %cst_55 = arith.constant 3465.70947 : f32
    %161 = vector.broadcast %cst_55 : f32 to vector<8x128xf32>
    %162 = arith.addf %160, %161 : vector<8x128xf32>
    %163 = arith.mulf %162, %0 : vector<8x128xf32>
    %cst_56 = arith.constant 14484.9141 : f32
    %164 = vector.broadcast %cst_56 : f32 to vector<8x128xf32>
    %165 = arith.addf %163, %164 : vector<8x128xf32>
    %166 = arith.mulf %165, %0 : vector<8x128xf32>
    %cst_57 = arith.constant 32281.0645 : f32
    %167 = vector.broadcast %cst_57 : f32 to vector<8x128xf32>
    %168 = arith.addf %166, %167 : vector<8x128xf32>
    %169 = arith.mulf %168, %0 : vector<8x128xf32>
    %cst_58 = arith.constant 29969.5938 : f32
    %170 = vector.broadcast %cst_58 : f32 to vector<8x128xf32>
    %171 = arith.addf %169, %170 : vector<8x128xf32>
    %172 = tpu.reciprocal %171 {approx = true} : vector<8x128xf32> -> vector<8x128xf32>
    %173 = arith.mulf %171, %172 : vector<8x128xf32>
    %cst_59 = arith.constant 2.000000e+00 : f32
    %174 = vector.broadcast %cst_59 : f32 to vector<8x128xf32>
    %175 = arith.subf %174, %173 : vector<8x128xf32>
    %176 = arith.mulf %172, %175 : vector<8x128xf32>
    %177 = arith.mulf %152, %176 : vector<8x128xf32>
    %178 = math.log %177 : vector<8x128xf32>
    %179 = arith.addf %43, %178 : vector<8x128xf32>
    %cst_60 = arith.constant dense<0.000000e+00> : vector<128xf32>
    %180 = vector.multi_reduction <add>, %179, %cst_60 [0] : vector<8x128xf32> to vector<128xf32>
    %181 = vector.shape_cast %180 : vector<128xf32> to vector<1x128xf32>
    %c0_61 = arith.constant 0 : index
    %c0_62 = arith.constant 0 : index
    %182 = vector.load %arg5[%c0_61, %c0_62] : memref<1x128xf32, #tpu.memory_space<vmem>>, vector<1x128xf32>
    tpu.vector_store %arg5[%c0_61, %c0_62], %181 {strides = array<i32>} : memref<1x128xf32, #tpu.memory_space<vmem>>, vector<1x128xf32>,
    return
  }
  func.func @transform_0(%arg0: i32, %arg1: i32) -> (i32, i32) {
    %c0_i32 = arith.constant 0 : i32
    return %arg0, %arg1 : i32, i32
  }
  func.func @transform_1(%arg0: i32, %arg1: i32) -> (i32, i32) {
    %c0_i32 = arith.constant 0 : i32
    return %arg0, %arg1 : i32, i32
  }
  func.func @transform_2(%arg0: i32, %arg1: i32) -> (i32, i32) {
    %c0_i32 = arith.constant 0 : i32
    return %arg0, %arg1 : i32, i32
  }
  func.func @transform_3(%arg0: i32, %arg1: i32) -> (i32, i32) {
    %c0_i32 = arith.constant 0 : i32
    return %arg0, %arg1 : i32, i32
  }
}

</mosaic_0001>

<llo_original>
// kernel: tpu_custom_call.1
$region0: #{tpu_custom_call.1}
  #allocation0 [shape = 'u32[]', space=smem, size = 0x4, offset = 0x4, fixed_abs, tag = 'smem constant byte address 0x4 - core index']
  #allocation1 [shape = 'u32[144,128]{1,0:T(1,128)}', space=vmem, size = 0x12000, scoped, tag = 'internal scratch']
  %s0 = inlined_call_operand.hbm [shape: f32[8,128], index: 0, kind: input, shape index: {}]
  %s1 = inlined_call_operand.hbm [shape: f32[8,128], index: 1, kind: input, shape index: {}]
  %s2 = inlined_call_operand.hbm [shape: f32[8,128], index: 2, kind: input, shape index: {}]
  %s3 = inlined_call_operand.hbm [shape: f32[1,128], index: 3, kind: output, shape index: {}]
  %s4 = sld [smem:[#allocation0]]
  $region34: #{tpu_custom_call.1} parent=0
    _
  %s6 = ssub.s32 1, %s4
  %s7 = scalar_select 0, %s6, %s4
  $region1: #{tpu_custom_call.1} parent=0
    #allocation2 [shape = 'u8[4096]{0}', space=vmem, size = 0x1000, scoped, tag = 'input window, operand 0, single buffered']
    #allocation3 [shape = 's32[1]{0}', space=sflag, size = 0x4, scoped, tag = 'scoped memory for tpu_custom_call.1']
    #allocation4 [shape = 's32[1]{0}', space=sflag, size = 0x4, scoped, tag = 'scoped memory for tpu_custom_call.1']
    #allocation5 [shape = 'u8[4096]{0}', space=vmem, size = 0x1000, scoped, tag = 'input window, operand 1, single buffered']
    #allocation6 [shape = 's32[1]{0}', space=sflag, size = 0x4, scoped, tag = 'scoped memory for tpu_custom_call.1']
    #allocation7 [shape = 'u8[4096]{0}', space=vmem, size = 0x1000, scoped, tag = 'input window, operand 2, single buffered']
    #allocation8 [shape = 'u8[512]{0}', space=vmem, size = 0x400, scoped, tag = 'output window, operand 0, single buffered']
    %8 = vsyncpa [#allocation3], 0
    %9 = vsyncpa [#allocation6], 0
    %10 = vsyncpa [#allocation4], 0
    // Predicated region
    $region2: #{tpu_custom_call.1} parent=1 // pred_check
      _
    $region3: #{tpu_custom_call.1} parent=1 // pred_check_branch
      %12 = sbr.rel (0) target = $region5
    $region4: #{tpu_custom_call.1} parent=1 // pred_region
      %s14 = ssub.s32 128, 128
      %15 = vsyncadd [#allocation3], %s14
      %s17 = sshll.u32 [#allocation2], 4
      %s18 = int_to_ptr.vmem [resolvable:$true] %s17
      %20 = dma.hbm_to_vmem [thread:$0]  %s0, 128, %s18, [#allocation3]
    $region5: #{tpu_custom_call.1} parent=1 // pred_fallthru
      _
    // Predicated region
    $region6: #{tpu_custom_call.1} parent=1 // pred_check
      _
    $region7: #{tpu_custom_call.1} parent=1 // pred_check_branch
      %22 = sbr.rel (0) target = $region9
    $region8: #{tpu_custom_call.1} parent=1 // pred_region
      %s24 = ssub.s32 128, 128
      %25 = vsyncadd [#allocation6], %s24
      %s27 = sshll.u32 [#allocation5], 4
      %s28 = int_to_ptr.vmem [resolvable:$true] %s27
      %30 = dma.hbm_to_vmem [thread:$0]  %s1, 128, %s28, [#allocation6]
    $region9: #{tpu_custom_call.1} parent=1 // pred_fallthru
      _
    // Predicated region
    $region10: #{tpu_custom_call.1} parent=1 // pred_check
      _
    $region11: #{tpu_custom_call.1} parent=1 // pred_check_branch
      %32 = sbr.rel (0) target = $region13
    $region12: #{tpu_custom_call.1} parent=1 // pred_region
      %s34 = ssub.s32 128, 128
      %35 = vsyncadd [#allocation6], %s34
      %s37 = sshll.u32 [#allocation7], 4
      %s38 = int_to_ptr.vmem [resolvable:$true] %s37
      %40 = dma.hbm_to_vmem [thread:$0]  %s2, 128, %s38, [#allocation6]
    $region13: #{tpu_custom_call.1} parent=1 // pred_fallthru
      _
    // Predicated region
    $region14: #{tpu_custom_call.1} parent=1 // pred_check
      _
    $region15: #{tpu_custom_call.1} parent=1 // pred_check_branch
      %42 = sbr.rel (0) target = $region17
    $region16: #{tpu_custom_call.1} parent=1 // pred_region
      %43 = dma.done [#allocation3], 128
    $region17: #{tpu_custom_call.1} parent=1 // pred_fallthru
      _
    // Predicated region
    $region18: #{tpu_custom_call.1} parent=1 // pred_check
      _
    $region19: #{tpu_custom_call.1} parent=1 // pred_check_branch
      %45 = sbr.rel (0) target = $region21
    $region20: #{tpu_custom_call.1} parent=1 // pred_region
      %46 = dma.done [#allocation6], 128
    $region21: #{tpu_custom_call.1} parent=1 // pred_fallthru
      _
    // Predicated region
    $region22: #{tpu_custom_call.1} parent=1 // pred_check
      _
    $region23: #{tpu_custom_call.1} parent=1 // pred_check_branch
      %48 = sbr.rel (0) target = $region25
    $region24: #{tpu_custom_call.1} parent=1 // pred_region
      %49 = dma.done [#allocation6], 128
    $region25: #{tpu_custom_call.1} parent=1 // pred_fallthru
      _
    %v50 = vld [vmem:[#allocation2] sm:$0xff]
    %v51 = vld [vmem:[#allocation5] sm:$0xff]
    %v52 = vld [vmem:[#allocation7] sm:$0xff]
    %v53 = vadd.f32 %v52, %v51
    %v54 = vadd.f32 %v53, 1e-08
    %v55 = vlog2.pop %v54
    %v56 = vmul.f32 %v55, 0.6931472
    %v57 = vadd.f32 %v52, 1e-08
    %v58 = vlog2.pop %v57
    %v59 = vmul.f32 %v58, 0.6931472
    %v60 = vsub.f32 %v59, %v56
    %v61 = vmul.f32 %v52, %v60
    %v62 = vadd.f32 %v51, 1e-08
    %v63 = vlog2.pop %v62
    %v64 = vmul.f32 %v63, 0.6931472
    %v65 = vsub.f32 %v64, %v56
    %v66 = vmul.f32 %v50, %v65
    %v67 = vadd.f32 %v61, %v66
    %v68 = vadd.f32 %v50, %v52
    %v69 = vsub.f32 %v68, 1.0
    %v70 = vsub.f32 %v52, 1.0
    %v71 = vadd.f32 %v69, 0.5
    %v72 = vadd.f32 %v69, 5.5
    %v73 = vlog2.pop %v72
    %v74 = vmul.f32 %v73, 0.6931472
    %v75 = vmul.f32 %v71, %v74
    %v76 = vadd.f32 %v67, %v75
    %v77 = vadd.f32 %v70, 0.5
    %v78 = vadd.f32 %v70, 5.5
    %v79 = vlog2.pop %v78
    %v80 = vmul.f32 %v79, 0.6931472
    %v81 = vmul.f32 %v77, %v80
    %v82 = vsub.f32 %v76, %v81
    %v83 = vadd.f32 %v50, 0.5
    %v84 = vadd.f32 %v50, 5.5
    %v85 = vlog2.pop %v84
    %v86 = vmul.f32 %v85, 0.6931472
    %v87 = vmul.f32 %v83, %v86
    %v88 = vsub.f32 %v82, %v87
    %v89 = vadd.f32 %v69, 33.458332
    %v90 = vmul.f32 %v89, %v69
    %v91 = vadd.f32 %v90, 466.3342
    %v92 = vmul.f32 %v91, %v69
    %v93 = vadd.f32 %v92, 3465.7095
    %v94 = vmul.f32 %v93, %v69
    %v95 = vadd.f32 %v94, 14484.914
    %v96 = vmul.f32 %v95, %v69
    %v97 = vadd.f32 %v96, 32281.064
    %v98 = vmul.f32 %v97, %v69
    %v99 = vadd.f32 %v98, 29969.594
    %v100 = vadd.f32 %v69, 21.0
    %v101 = vmul.f32 %v100, %v69
    %v102 = vadd.f32 %v101, 175.0
    %v103 = vmul.f32 %v102, %v69
    %v104 = vadd.f32 %v103, 735.0
    %v105 = vmul.f32 %v104, %v69
    %v106 = vadd.f32 %v105, 1624.0
    %v107 = vmul.f32 %v106, %v69
    %v108 = vadd.f32 %v107, 1764.0
    %v109 = vmul.f32 %v108, %v69
    %v110 = vadd.f32 %v109, 720.0
    %v111 = vrcp.pop %v110
    %v112 = vmul.f32 %v110, %v111
    %v113 = vsub.f32 2.0, %v112
    %v114 = vmul.f32 %v111, %v113
    %v115 = vmul.f32 %v99, %v114
    %v116 = vadd.f32 %v70, 21.0
    %v117 = vmul.f32 %v116, %v70
    %v118 = vadd.f32 %v117, 175.0
    %v119 = vmul.f32 %v118, %v70
    %v120 = vadd.f32 %v119, 735.0
    %v121 = vmul.f32 %v120, %v70
    %v122 = vadd.f32 %v121, 1624.0
    %v123 = vmul.f32 %v122, %v70
    %v124 = vadd.f32 %v123, 1764.0
    %v125 = vmul.f32 %v124, %v70
    %v126 = vadd.f32 %v125, 720.0
    %v127 = vmul.f32 %v115, %v126
    %v128 = vadd.f32 %v70, 33.458332
    %v129 = vmul.f32 %v128, %v70
    %v130 = vadd.f32 %v129, 466.3342
    %v131 = vmul.f32 %v130, %v70
    %v132 = vadd.f32 %v131, 3465.7095
    %v133 = vmul.f32 %v132, %v70
    %v134 = vadd.f32 %v133, 14484.914
    %v135 = vmul.f32 %v134, %v70
    %v136 = vadd.f32 %v135, 32281.064
    %v137 = vmul.f32 %v136, %v70
    %v138 = vadd.f32 %v137, 29969.594
    %v139 = vrcp.pop %v138
    %v140 = vmul.f32 %v138, %v139
    %v141 = vsub.f32 2.0, %v140
    %v142 = vmul.f32 %v139, %v141
    %v143 = vmul.f32 %v127, %v142
    %v144 = vadd.f32 %v50, 21.0
    %v145 = vmul.f32 %v144, %v50
    %v146 = vadd.f32 %v145, 175.0
    %v147 = vmul.f32 %v146, %v50
    %v148 = vadd.f32 %v147, 735.0
    %v149 = vmul.f32 %v148, %v50
    %v150 = vadd.f32 %v149, 1624.0
    %v151 = vmul.f32 %v150, %v50
    %v152 = vadd.f32 %v151, 1764.0
    %v153 = vmul.f32 %v152, %v50
    %v154 = vadd.f32 %v153, 720.0
    %v155 = vmul.f32 %v143, %v154
    %v156 = vadd.f32 %v50, 33.458332
    %v157 = vmul.f32 %v156, %v50
    %v158 = vadd.f32 %v157, 466.3342
    %v159 = vmul.f32 %v158, %v50
    %v160 = vadd.f32 %v159, 3465.7095
    %v161 = vmul.f32 %v160, %v50
    %v162 = vadd.f32 %v161, 14484.914
    %v163 = vmul.f32 %v162, %v50
    %v164 = vadd.f32 %v163, 32281.064
    %v165 = vmul.f32 %v164, %v50
    %v166 = vadd.f32 %v165, 29969.594
    %v167 = vrcp.pop %v166
    %v168 = vmul.f32 %v166, %v167
    %v169 = vsub.f32 2.0, %v168
    %v170 = vmul.f32 %v167, %v169
    %v171 = vmul.f32 %v155, %v170
    %v172 = vlog2.pop %v171
    %v173 = vmul.f32 %v172, 0.6931472
    %v174 = vadd.f32 %v88, %v173
    %v175 = vrot.slane %v174, 4
    %v176 = vadd.f32 %v174, %v175
    %v177 = vrot.slane %v176, 2
    %v178 = vadd.f32 %v176, %v177
    %v179 = vrot.slane %v178, 1
    %v180 = vadd.f32 %v178, %v179
    %181 = vst [vmem:[#allocation8] sm:$0x1] %v180
    // Predicated region
    $region26: #{tpu_custom_call.1} parent=1 // pred_check
      _
    $region27: #{tpu_custom_call.1} parent=1 // pred_check_branch
      %183 = sbr.rel (0) target = $region29
    $region28: #{tpu_custom_call.1} parent=1 // pred_region
      %s185 = ssub.s32 16, 16
      %186 = vsyncadd [#allocation4], %s185
      %s188 = sshll.u32 [#allocation8], 4
      %s189 = int_to_ptr.vmem [resolvable:$true] %s188
      %191 = dma.vmem_to_hbm [thread:$0]  %s189, 16, %s3, [#allocation4]
    $region29: #{tpu_custom_call.1} parent=1 // pred_fallthru
      _
    // Predicated region
    $region30: #{tpu_custom_call.1} parent=1 // pred_check
      _
    $region31: #{tpu_custom_call.1} parent=1 // pred_check_branch
      %193 = sbr.rel (0) target = $region33
    $region32: #{tpu_custom_call.1} parent=1 // pred_region
      %194 = dma.done [#allocation4], 16
    $region33: #{tpu_custom_call.1} parent=1 // pred_fallthru
      _
    %195 = vsyncpa [#allocation3], 1
    %196 = vsyncpa [#allocation6], 1
    %197 = vsyncpa [#allocation4], 1

</llo_original>
